<compile_context>
chip_gen: v7x
topology: tpu7x:2x2x1
jax: 0.10.0
libtpu: 0.0.40
codegen_flags: <defaults>
</compile_context>

<pallas_src>
import numpy as np
import jax
import jax.numpy as jnp
from jax.experimental import pallas as pl
from jax.experimental.pallas import tpu as pltpu


_LANE = 128


def _cdiv(a, b):
    return -(-a // b)


def _parse_clause(available_predicates, clause_string, initial_clause_weight,
                  min_weight=0.0, max_weight=500.0):
    """Replicates ClauseEnhancer.__init__ parsing (no torch)."""
    weight_str, clause = clause_string.split(':')
    if weight_str == '_':
        initial_weight = float(initial_clause_weight)
    else:
        initial_weight = float(weight_str)
    # TODO(synk): in PyTorch the clause weight is a learnable nn.Parameter that
    # GodelBoostConormApprox clamps at every forward; here it is baked as a
    # static, pre-clamped Python scalar, so it is not trainable through the
    # kernel.
    clause_weight = float(np.clip(initial_weight, min_weight, max_weight))

    gather_idx, signs = [], []
    for lit in clause.split(','):
        sign = 1.0
        if lit[0] == 'n':
            sign = -1.0
            lit = lit[1:]
        gather_idx.append(int(available_predicates.index(lit)))
        signs.append(float(sign))
    return gather_idx, signs, clause_weight


class FusedClauseEnhancerPallas:
    """One pallas_call evaluating a list of KENN clauses over shared ground atoms.

    Fast path: `enhance_transposed(x_t)` with x_t in the lane-dense [P, B]
    layout.  Returns (scattered_sum_t [P, B], deltas_t [sum(L_c), B]) where
    scattered_sum_t is the sum of every clause's scattered delta (exactly what
    the downstream KnowledgeEnhancer reduction needs) and deltas_t stacks the
    per-clause delta rows in clause order.
    """

    def __init__(self, available_predicates, clause_strings,
                 initial_clause_weight, min_weight=0.0, max_weight=500.0,
                 max_batch_tile=8192):
        if isinstance(clause_strings, str):
            clause_strings = [clause_strings]
        self.num_predicates = len(available_predicates)
        self.clauses = [
            _parse_clause(available_predicates, cs, initial_clause_weight,
                          min_weight, max_weight)
            for cs in clause_strings
        ]
        self.literal_counts = [len(c[0]) for c in self.clauses]
        self.total_literals = sum(self.literal_counts)
        self.max_batch_tile = int(max_batch_tile)

    # --------------------------------------------------------------- kernel
    def _kernel(self, x_ref, scat_ref, delta_ref):
        """x_ref: [P, TB]   scat_ref: [P, TB]   delta_ref: [Ltot, TB].

        Lane axis = batch.  All per-clause constants are Python scalars,
        statically unrolled — no captured array constants, no MXU matmuls,
        no cross-lane reductions (only tiny cross-sublane ones over L rows).
        """
        P = self.num_predicates
        TB = x_ref.shape[1]
        f32 = jnp.float32

        contrib = [None] * P   # per-predicate scatter rows, summed over clauses
        delta_rows = []        # per-literal delta rows, clause-major order

        for gather_idx, signs, weight in self.clauses:
            L = len(gather_idx)
            # Gather: L static row reads, packed into one (L, TB) value.
            z = jnp.concatenate(
                [x_ref[pl.ds(gather_idx[k], 1), :].astype(f32)
                 if signs[k] > 0.0
                 else -x_ref[pl.ds(gather_idx[k], 1), :].astype(f32)
                 for k in range(L)],
                axis=0)                                         # (L, TB)

            # Softmax over the tiny literal (sublane) axis.
            m = jnp.max(z, axis=0, keepdims=True)               # (1, TB)
            e = jnp.exp(z - m)                                  # EUP
            inv = pl.reciprocal(jnp.sum(e, axis=0, keepdims=True))
            sm = e * inv                                        # (L, TB)

            # Per-literal deltas.  Within a clause, duplicate predicates
            # resolve as last-write-wins (matches torch index_put_); across
            # clauses the scattered deltas accumulate (KnowledgeEnhancer sum).
            clause_last = {}
            for k in range(L):
                d = (signs[k] * weight) * sm[k:k + 1, :]        # (1, TB)
                delta_rows.append(d)
                clause_last[gather_idx[k]] = d
            for p_idx, d in clause_last.items():
                contrib[p_idx] = d if contrib[p_idx] is None else contrib[p_idx] + d

        # One lane-dense store of every clause's delta rows.
        delta_ref[...] = jnp.concatenate(delta_rows, axis=0).astype(delta_ref.dtype)

        # Assemble the full (P, TB) scattered tile in registers, store once.
        zero_row = jnp.zeros((1, TB), f32)
        scat_rows = [contrib[p] if contrib[p] is not None else zero_row
                     for p in range(P)]
        scat_ref[...] = jnp.concatenate(scat_rows, axis=0).astype(scat_ref.dtype)

    # --------------------------------------------------------------- tiling
    def _tiling(self, B):
        """Pick (batch_tile, padded_B).

        The tile is a 128-multiple, <= max_batch_tile, and the grid has >= 2
        steps whenever B > 128 so "parallel" can shard over v7x's 2 TCs.  The
        batch is padded (zeros) up to a tile multiple instead of ever taking a
        giant single block.
        """
        if B <= _LANE:
            tb = _LANE
        else:
            steps = max(2, _cdiv(B, self.max_batch_tile))
            tb = _cdiv(_cdiv(B, steps), _LANE) * _LANE
        b_pad = _cdiv(B, tb) * tb
        return tb, b_pad

    # ------------------------------------------------------------ fast path
    def enhance_transposed(self, x_t):
        """x_t: [P, B] lane-dense.  Returns (scattered_sum_t [P,B], deltas_t [Ltot,B])."""
        P, B = x_t.shape
        assert P == self.num_predicates
        tb, b_pad = self._tiling(B)
        x_in = x_t if b_pad == B else jnp.pad(x_t, ((0, 0), (0, b_pad - B)))
        out_dtype = x_t.dtype
        ltot = self.total_literals

        scat_t, delta_t = pl.pallas_call(
            self._kernel,
            out_shape=(
                jax.ShapeDtypeStruct((P, b_pad), out_dtype),      # Σ_clauses scatter
                jax.ShapeDtypeStruct((ltot, b_pad), out_dtype),   # stacked deltas
            ),
            grid_spec=pltpu.PrefetchScalarGridSpec(
                num_scalar_prefetch=0,
                grid=(b_pad // tb,),
                in_specs=[pl.BlockSpec((P, tb), lambda i: (0, i))],
                out_specs=[pl.BlockSpec((P, tb), lambda i: (0, i)),
                           pl.BlockSpec((ltot, tb), lambda i: (0, i))],
            ),
            compiler_params=pltpu.CompilerParams(
                dimension_semantics=("parallel",)),
        )(x_in)

        if b_pad != B:
            scat_t = scat_t[:, :B]
            delta_t = delta_t[:, :B]
        return scat_t, delta_t


class ClauseEnhancerPallas(FusedClauseEnhancerPallas):
    """Single-clause, PyTorch-layout-compatible wrapper ([B, P] in / out).

    The transposes in __call__ are pure layout plumbing (full extra HBM
    passes per clause); prefer transposing ground_atoms once at the model
    level and calling `enhance_transposed` on the fused enhancer.
    """

    def __init__(self, available_predicates, clause_string,
                 initial_clause_weight, **kwargs):
        super().__init__(available_predicates, [clause_string],
                         initial_clause_weight, **kwargs)

    def __call__(self, ground_atoms):
        scat_t, delta_t = self.enhance_transposed(ground_atoms.T)
        return scat_t.T, delta_t.T


# -------------------------------------------------------------------- refs
def _reference_clause(ground_atoms, gather_idx, signs, weight):
    """Pure-JAX mirror of the PyTorch forward for one clause."""
    idx = jnp.asarray(gather_idx, dtype=jnp.int32)
    sg = jnp.asarray(signs, dtype=jnp.float32)
    sel = ground_atoms[..., idx]
    sm = jax.nn.softmax(sel * sg, axis=-1)
    delta = sg * weight * sm
    scat = jnp.zeros_like(ground_atoms).at[..., idx].set(delta)
    return scat, delta


def _reference_fused(ground_atoms, clauses):
    scats, deltas = [], []
    for gather_idx, signs, weight in clauses:
        s, d = _reference_clause(ground_atoms, gather_idx, signs, weight)
        scats.append(s)
        deltas.append(d)
    return sum(scats), jnp.concatenate(deltas, axis=-1)


if __name__ == "__main__":
    preds = ["Dog", "Cat", "Animal", "Pet",
             "Wild", "Bird", "Fish", "Mammal"]          # P = 8
    clause_strings = ["_:nDog,Animal,Pet",              # learned weight, L = 3
                      "3.0:nCat,Animal",                # fixed weight,   L = 2
                      "_:nBird,nFish,Animal"]           # learned weight, L = 3
    P = len(preds)

    fused = FusedClauseEnhancerPallas(preds, clause_strings,
                                      initial_clause_weight=0.5)
    single = ClauseEnhancerPallas(preds, clause_strings[0],
                                  initial_clause_weight=0.5)

    key = jax.random.PRNGKey(0)

    # Small batch (single padded 128-lane block), a 2-step 128-lane grid, and a
    # non-128-multiple batch exercising the padded-tail path.
    for B in (16, 256, 300):
        key, sub = jax.random.split(key)
        ground_atoms = jax.random.normal(sub, (B, P), dtype=jnp.float32)
        x_t = ground_atoms.T            # transpose ONCE, shared by every clause

        scat_t, delta_t = fused.enhance_transposed(x_t)
        jax.block_until_ready((scat_t, delta_t))

        ref_scat, ref_delta = _reference_fused(ground_atoms, fused.clauses)
        np.testing.assert_allclose(np.asarray(scat_t.T), np.asarray(ref_scat),
                                   rtol=1e-5, atol=1e-5)
        np.testing.assert_allclose(np.asarray(delta_t.T), np.asarray(ref_delta),
                                   rtol=1e-5, atol=1e-5)

    # Module-compatible single-clause path ([B, P] layout, matches torch forward).
    key, sub = jax.random.split(key)
    ground_atoms = jax.random.normal(sub, (256, P), dtype=jnp.float32)
    scattered, delta = single(ground_atoms)
    jax.block_until_ready((scattered, delta))
    ref_scat, ref_delta = _reference_clause(ground_atoms, *single.clauses[0])
    np.testing.assert_allclose(np.asarray(scattered), np.asarray(ref_scat),
                               rtol=1e-5, atol=1e-5)
    np.testing.assert_allclose(np.asarray(delta), np.asarray(ref_delta),
                               rtol=1e-5, atol=1e-5)

    print("KERNEL_OK")
</pallas_src>

<mosaic_0001>
module attributes {stable_mosaic.version = 11 : i64} {
  func.func @_kernel(%arg0: i32, %arg1: memref<8x128xf32, #tpu.memory_space<vmem>>, %arg2: memref<8x128xf32, #tpu.memory_space<vmem>>, %arg3: memref<8x128xf32, #tpu.memory_space<vmem>>) attributes {dimension_semantics = [#tpu.dimension_semantics<parallel>], iteration_bounds = array<i64: 1>, scalar_prefetch = 0 : i64, scratch_operands = 0 : i64, tpu.core_type = #tpu.core_type<tc>, window_params = [{transform_indices = @transform_0, window_bounds = array<i64: 8, 128>}, {transform_indices = @transform_1, window_bounds = array<i64: 8, 128>}, {transform_indices = @transform_2, window_bounds = array<i64: 8, 128>}]} {
    %c0 = arith.constant 0 : index
    %c0_0 = arith.constant 0 : index
    %0 = vector.load %arg1[%c0, %c0_0] : memref<8x128xf32, #tpu.memory_space<vmem>>, vector<1x128xf32>
    %cst = arith.constant 0.000000e+00 : f32
    %1 = vector.broadcast %cst : f32 to vector<1x128xf32>
    %2 = arith.subf %1, %0 : vector<1x128xf32>
    %c2 = arith.constant 2 : index
    %c0_1 = arith.constant 0 : index
    %3 = vector.load %arg1[%c2, %c0_1] : memref<8x128xf32, #tpu.memory_space<vmem>>, vector<1x128xf32>
    %c3 = arith.constant 3 : index
    %c0_2 = arith.constant 0 : index
    %4 = vector.load %arg1[%c3, %c0_2] : memref<8x128xf32, #tpu.memory_space<vmem>>, vector<1x128xf32>
    %5 = tpu.concatenate %2, %3, %4 in 0 : vector<1x128xf32>, vector<1x128xf32>, vector<1x128xf32> -> vector<3x128xf32>
    %cst_3 = arith.constant dense<0xFF800000> : vector<128xf32>
    %6 = vector.multi_reduction <maximumf>, %5, %cst_3 [0] : vector<3x128xf32> to vector<128xf32>
    %7 = vector.shape_cast %6 : vector<128xf32> to vector<1x128xf32>
    %8 = vector.broadcast %7 : vector<1x128xf32> to vector<3x128xf32>
    %9 = arith.subf %5, %8 : vector<3x128xf32>
    %10 = math.exp %9 : vector<3x128xf32>
    %cst_4 = arith.constant dense<0.000000e+00> : vector<128xf32>
    %11 = vector.multi_reduction <add>, %10, %cst_4 [0] : vector<3x128xf32> to vector<128xf32>
    %12 = vector.shape_cast %11 : vector<128xf32> to vector<1x128xf32>
    %13 = tpu.reciprocal %12 : vector<1x128xf32> -> vector<1x128xf32>
    %14 = vector.broadcast %13 : vector<1x128xf32> to vector<3x128xf32>
    %15 = arith.mulf %10, %14 : vector<3x128xf32>
    %16 = vector.extract_strided_slice %15 {offsets = [0, 0], sizes = [1, 128], strides = [1, 1]} : vector<3x128xf32> to vector<1x128xf32>
    %cst_5 = arith.constant -5.000000e-01 : f32
    %17 = vector.broadcast %cst_5 : f32 to vector<1x128xf32>
    %18 = arith.mulf %17, %16 : vector<1x128xf32>
    %19 = vector.extract_strided_slice %15 {offsets = [1, 0], sizes = [1, 128], strides = [1, 1]} : vector<3x128xf32> to vector<1x128xf32>
    %cst_6 = arith.constant 5.000000e-01 : f32
    %20 = vector.broadcast %cst_6 : f32 to vector<1x128xf32>
    %21 = arith.mulf %20, %19 : vector<1x128xf32>
    %22 = vector.extract_strided_slice %15 {offsets = [2, 0], sizes = [1, 128], strides = [1, 1]} : vector<3x128xf32> to vector<1x128xf32>
    %cst_7 = arith.constant 5.000000e-01 : f32
    %23 = vector.broadcast %cst_7 : f32 to vector<1x128xf32>
    %24 = arith.mulf %23, %22 : vector<1x128xf32>
    %c1 = arith.constant 1 : index
    %c0_8 = arith.constant 0 : index
    %25 = vector.load %arg1[%c1, %c0_8] : memref<8x128xf32, #tpu.memory_space<vmem>>, vector<1x128xf32>
    %cst_9 = arith.constant 0.000000e+00 : f32
    %26 = vector.broadcast %cst_9 : f32 to vector<1x128xf32>
    %27 = arith.subf %26, %25 : vector<1x128xf32>
    %c2_10 = arith.constant 2 : index
    %c0_11 = arith.constant 0 : index
    %28 = vector.load %arg1[%c2_10, %c0_11] : memref<8x128xf32, #tpu.memory_space<vmem>>, vector<1x128xf32>
    %29 = tpu.concatenate %27, %28 in 0 : vector<1x128xf32>, vector<1x128xf32> -> vector<2x128xf32>
    %cst_12 = arith.constant dense<0xFF800000> : vector<128xf32>
    %30 = vector.multi_reduction <maximumf>, %29, %cst_12 [0] : vector<2x128xf32> to vector<128xf32>
    %31 = vector.shape_cast %30 : vector<128xf32> to vector<1x128xf32>
    %32 = vector.broadcast %31 : vector<1x128xf32> to vector<2x128xf32>
    %33 = arith.subf %29, %32 : vector<2x128xf32>
    %34 = math.exp %33 : vector<2x128xf32>
    %cst_13 = arith.constant dense<0.000000e+00> : vector<128xf32>
    %35 = vector.multi_reduction <add>, %34, %cst_13 [0] : vector<2x128xf32> to vector<128xf32>
    %36 = vector.shape_cast %35 : vector<128xf32> to vector<1x128xf32>
    %37 = tpu.reciprocal %36 : vector<1x128xf32> -> vector<1x128xf32>
    %38 = vector.broadcast %37 : vector<1x128xf32> to vector<2x128xf32>
    %39 = arith.mulf %34, %38 : vector<2x128xf32>
    %40 = vector.extract_strided_slice %39 {offsets = [0, 0], sizes = [1, 128], strides = [1, 1]} : vector<2x128xf32> to vector<1x128xf32>
    %cst_14 = arith.constant -3.000000e+00 : f32
    %41 = vector.broadcast %cst_14 : f32 to vector<1x128xf32>
    %42 = arith.mulf %41, %40 : vector<1x128xf32>
    %43 = vector.extract_strided_slice %39 {offsets = [1, 0], sizes = [1, 128], strides = [1, 1]} : vector<2x128xf32> to vector<1x128xf32>
    %cst_15 = arith.constant 3.000000e+00 : f32
    %44 = vector.broadcast %cst_15 : f32 to vector<1x128xf32>
    %45 = arith.mulf %44, %43 : vector<1x128xf32>
    %46 = arith.addf %21, %45 : vector<1x128xf32>
    %c5 = arith.constant 5 : index
    %c0_16 = arith.constant 0 : index
    %47 = vector.load %arg1[%c5, %c0_16] : memref<8x128xf32, #tpu.memory_space<vmem>>, vector<1x128xf32>
    %cst_17 = arith.constant 0.000000e+00 : f32
    %48 = vector.broadcast %cst_17 : f32 to vector<1x128xf32>
    %49 = arith.subf %48, %47 : vector<1x128xf32>
    %c6 = arith.constant 6 : index
    %c0_18 = arith.constant 0 : index
    %50 = vector.load %arg1[%c6, %c0_18] : memref<8x128xf32, #tpu.memory_space<vmem>>, vector<1x128xf32>
    %cst_19 = arith.constant 0.000000e+00 : f32
    %51 = vector.broadcast %cst_19 : f32 to vector<1x128xf32>
    %52 = arith.subf %51, %50 : vector<1x128xf32>
    %c2_20 = arith.constant 2 : index
    %c0_21 = arith.constant 0 : index
    %53 = vector.load %arg1[%c2_20, %c0_21] : memref<8x128xf32, #tpu.memory_space<vmem>>, vector<1x128xf32>
    %54 = tpu.concatenate %49, %52, %53 in 0 : vector<1x128xf32>, vector<1x128xf32>, vector<1x128xf32> -> vector<3x128xf32>
    %cst_22 = arith.constant dense<0xFF800000> : vector<128xf32>
    %55 = vector.multi_reduction <maximumf>, %54, %cst_22 [0] : vector<3x128xf32> to vector<128xf32>
    %56 = vector.shape_cast %55 : vector<128xf32> to vector<1x128xf32>
    %57 = vector.broadcast %56 : vector<1x128xf32> to vector<3x128xf32>
    %58 = arith.subf %54, %57 : vector<3x128xf32>
    %59 = math.exp %58 : vector<3x128xf32>
    %cst_23 = arith.constant dense<0.000000e+00> : vector<128xf32>
    %60 = vector.multi_reduction <add>, %59, %cst_23 [0] : vector<3x128xf32> to vector<128xf32>
    %61 = vector.shape_cast %60 : vector<128xf32> to vector<1x128xf32>
    %62 = tpu.reciprocal %61 : vector<1x128xf32> -> vector<1x128xf32>
    %63 = vector.broadcast %62 : vector<1x128xf32> to vector<3x128xf32>
    %64 = arith.mulf %59, %63 : vector<3x128xf32>
    %65 = vector.extract_strided_slice %64 {offsets = [0, 0], sizes = [1, 128], strides = [1, 1]} : vector<3x128xf32> to vector<1x128xf32>
    %cst_24 = arith.constant -5.000000e-01 : f32
    %66 = vector.broadcast %cst_24 : f32 to vector<1x128xf32>
    %67 = arith.mulf %66, %65 : vector<1x128xf32>
    %68 = vector.extract_strided_slice %64 {offsets = [1, 0], sizes = [1, 128], strides = [1, 1]} : vector<3x128xf32> to vector<1x128xf32>
    %cst_25 = arith.constant -5.000000e-01 : f32
    %69 = vector.broadcast %cst_25 : f32 to vector<1x128xf32>
    %70 = arith.mulf %69, %68 : vector<1x128xf32>
    %71 = vector.extract_strided_slice %64 {offsets = [2, 0], sizes = [1, 128], strides = [1, 1]} : vector<3x128xf32> to vector<1x128xf32>
    %cst_26 = arith.constant 5.000000e-01 : f32
    %72 = vector.broadcast %cst_26 : f32 to vector<1x128xf32>
    %73 = arith.mulf %72, %71 : vector<1x128xf32>
    %74 = arith.addf %46, %73 : vector<1x128xf32>
    %75 = tpu.concatenate %18, %21, %24, %42, %45, %67, %70, %73 in 0 : vector<1x128xf32>, vector<1x128xf32>, vector<1x128xf32>, vector<1x128xf32>, vector<1x128xf32>, vector<1x128xf32>, vector<1x128xf32>, vector<1x128xf32> -> vector<8x128xf32>
    %c0_27 = arith.constant 0 : index
    %c0_28 = arith.constant 0 : index
    %76 = vector.load %arg3[%c0_27, %c0_28] : memref<8x128xf32, #tpu.memory_space<vmem>>, vector<8x128xf32>
    tpu.vector_store %arg3[%c0_27, %c0_28], %75 {strides = array<i32>} : memref<8x128xf32, #tpu.memory_space<vmem>>, vector<8x128xf32>,
    %cst_29 = arith.constant 0.000000e+00 : f32
    %77 = vector.broadcast %cst_29 : f32 to vector<1x128xf32>
    %78 = tpu.concatenate %18, %42, %74, %24, %77, %67, %70, %77 in 0 : vector<1x128xf32>, vector<1x128xf32>, vector<1x128xf32>, vector<1x128xf32>, vector<1x128xf32>, vector<1x128xf32>, vector<1x128xf32>, vector<1x128xf32> -> vector<8x128xf32>
    %c0_30 = arith.constant 0 : index
    %c0_31 = arith.constant 0 : index
    %79 = vector.load %arg2[%c0_30, %c0_31] : memref<8x128xf32, #tpu.memory_space<vmem>>, vector<8x128xf32>
    tpu.vector_store %arg2[%c0_30, %c0_31], %78 {strides = array<i32>} : memref<8x128xf32, #tpu.memory_space<vmem>>, vector<8x128xf32>,
    return
  }
  func.func @transform_0(%arg0: i32) -> (i32, i32) {
    %c0_i32 = arith.constant 0 : i32
    %c0_i32_0 = arith.constant 0 : i32
    return %c0_i32, %arg0 : i32, i32
  }
  func.func @transform_1(%arg0: i32) -> (i32, i32) {
    %c0_i32 = arith.constant 0 : i32
    %c0_i32_0 = arith.constant 0 : i32
    return %c0_i32, %arg0 : i32, i32
  }
  func.func @transform_2(%arg0: i32) -> (i32, i32) {
    %c0_i32 = arith.constant 0 : i32
    %c0_i32_0 = arith.constant 0 : i32
    return %c0_i32, %arg0 : i32, i32
  }
}

</mosaic_0001>

<llo_original>
// kernel: tpu_custom_call.1
$region0: #{tpu_custom_call.1}
  #allocation0 [shape = 'u32[]', space=smem, size = 0x4, offset = 0x4, fixed_abs, tag = 'smem constant byte address 0x4 - core index']
  #allocation1 [shape = 'u32[144,128]{1,0:T(1,128)}', space=vmem, size = 0x12000, scoped, tag = 'internal scratch']
  %s0 = inlined_call_operand.hbm [shape: f32[8,128], index: 0, kind: input, shape index: {}]
  %s1 = inlined_call_operand.hbm [shape: f32[8,128], index: 1, kind: output, shape index: {0}]
  %s2 = inlined_call_operand.hbm [shape: f32[8,128], index: 2, kind: output, shape index: {1}]
  %3 = xla_tuple %s1, %s2
  %s4 = sld [smem:[#allocation0]]
  $region26: #{tpu_custom_call.1} parent=0
    _
  %s6 = ssub.s32 1, %s4
  %s7 = scalar_select 0, %s6, %s4
  $region1: #{tpu_custom_call.1} parent=0
    #allocation2 [shape = 'u8[4096]{0}', space=vmem, size = 0x1000, scoped, tag = 'input window, operand 0, single buffered']
    #allocation3 [shape = 's32[1]{0}', space=sflag, size = 0x4, scoped, tag = 'scoped memory for tpu_custom_call.1']
    #allocation4 [shape = 's32[1]{0}', space=sflag, size = 0x4, scoped, tag = 'scoped memory for tpu_custom_call.1']
    #allocation5 [shape = 'u8[4096]{0}', space=vmem, size = 0x1000, scoped, tag = 'output window, operand 0, single buffered']
    #allocation6 [shape = 'u8[4096]{0}', space=vmem, size = 0x1000, scoped, tag = 'output window, operand 1, single buffered']
    #allocation7 [shape = 's32[1]{0}', space=sflag, size = 0x4, scoped, tag = 'scoped memory for tpu_custom_call.1']
    %8 = vsyncpa [#allocation3], 0
    %9 = vsyncpa [#allocation4], 0
    %10 = vsyncpa [#allocation7], 0
    // Predicated region
    $region2: #{tpu_custom_call.1} parent=1 // pred_check
      _
    $region3: #{tpu_custom_call.1} parent=1 // pred_check_branch
      %12 = sbr.rel (0) target = $region5
    $region4: #{tpu_custom_call.1} parent=1 // pred_region
      %s14 = ssub.s32 128, 128
      %15 = vsyncadd [#allocation3], %s14
      %s17 = sshll.u32 [#allocation2], 4
      %s18 = int_to_ptr.vmem [resolvable:$true] %s17
      %20 = dma.hbm_to_vmem [thread:$0]  %s0, 128, %s18, [#allocation3]
    $region5: #{tpu_custom_call.1} parent=1 // pred_fallthru
      _
    // Predicated region
    $region6: #{tpu_custom_call.1} parent=1 // pred_check
      _
    $region7: #{tpu_custom_call.1} parent=1 // pred_check_branch
      %22 = sbr.rel (0) target = $region9
    $region8: #{tpu_custom_call.1} parent=1 // pred_region
      %23 = dma.done [#allocation3], 128
    $region9: #{tpu_custom_call.1} parent=1 // pred_fallthru
      _
    %v24 = vld [vmem:[#allocation2] sm:$0x1]
    %v25 = vsub.f32 0.0, %v24
    %v26 = vld [vmem:[#allocation2 + $0x2] sm:$0x1]
    %v27 = vld [vmem:[#allocation2 + $0x3] sm:$0x1]
    %v29 = vrot.slane %v26, 7
    %v32 = vrot.slane %v27, 6
    %vm34 = vcmask 1040384
    %v35 = vsel %vm34, %v25, %v29
    %vm36 = vcmask 1041408
    %v37 = vsel %vm36, %v35, %v32
    %vm38 = vcmask 1042432
    %v39 = vsel %vm38, %v37, -inf
    %v40 = vrot.slane %v39, 4
    %v41 = vmax.f32 %v39, %v40
    %v42 = vrot.slane %v41, 2
    %v43 = vmax.f32 %v41, %v42
    %v44 = vrot.slane %v43, 1
    %v45 = vmax.f32 %v43, %v44
    %v46 = vsub.f32 %v37, %v45
    %v47 = vmul.f32 %v46, 1.442695
    %v48 = vpow.pop %v47
    %v49 = vsel %vm38, %v48, 0.0
    %v50 = vrot.slane %v49, 4
    %v51 = vadd.f32 %v49, %v50
    %v52 = vrot.slane %v51, 2
    %v53 = vadd.f32 %v51, %v52
    %v54 = vrot.slane %v53, 1
    %v55 = vadd.f32 %v53, %v54
    %v56 = vrcp.pop %v55
    %v57 = vmul.f32 %v48, %v56
    %v58 = vmul.f32 %v57, -0.5
    %v59 = vmul.f32 %v57, 0.5
    %v60 = vld [vmem:[#allocation2 + $0x1] sm:$0x1]
    %v61 = vsub.f32 0.0, %v60
    %v62 = vsel %vm34, %v61, %v29
    %v63 = vsel %vm36, %v62, -inf
    %v64 = vrot.slane %v63, 4
    %v65 = vmax.f32 %v63, %v64
    %v66 = vrot.slane %v65, 2
    %v67 = vmax.f32 %v65, %v66
    %v68 = vrot.slane %v67, 1
    %v69 = vmax.f32 %v67, %v68
    %v70 = vsub.f32 %v62, %v69
    %v71 = vmul.f32 %v70, 1.442695
    %v72 = vpow.pop %v71
    %v73 = vsel %vm36, %v72, 0.0
    %v74 = vrot.slane %v73, 4
    %v75 = vadd.f32 %v73, %v74
    %v76 = vrot.slane %v75, 2
    %v77 = vadd.f32 %v75, %v76
    %v78 = vrot.slane %v77, 1
    %v79 = vadd.f32 %v77, %v78
    %v80 = vrcp.pop %v79
    %v81 = vmul.f32 %v72, %v80
    %v82 = vmul.f32 %v81, -3.0
    %v83 = vmul.f32 %v81, 3.0
    %v84 = vadd.f32 %v59, %v83
    %v85 = vld [vmem:[#allocation2 + $0x5] sm:$0x1]
    %v86 = vsub.f32 0.0, %v85
    %v87 = vld [vmem:[#allocation2 + $0x6] sm:$0x1]
    %v88 = vsub.f32 0.0, %v87
    %v90 = vrot.slane %v88, 7
    %v92 = vrot.slane %v26, 6
    %v94 = vsel %vm34, %v86, %v90
    %v95 = vsel %vm36, %v94, %v92
    %v96 = vsel %vm38, %v95, -inf
    %v97 = vrot.slane %v96, 4
    %v98 = vmax.f32 %v96, %v97
    %v99 = vrot.slane %v98, 2
    %v100 = vmax.f32 %v98, %v99
    %v101 = vrot.slane %v100, 1
    %v102 = vmax.f32 %v100, %v101
    %v103 = vsub.f32 %v95, %v102
    %v104 = vmul.f32 %v103, 1.442695
    %v105 = vpow.pop %v104
    %v106 = vsel %vm38, %v105, 0.0
    %v107 = vrot.slane %v106, 4
    %v108 = vadd.f32 %v106, %v107
    %v109 = vrot.slane %v108, 2
    %v110 = vadd.f32 %v108, %v109
    %v111 = vrot.slane %v110, 1
    %v112 = vadd.f32 %v110, %v111
    %v113 = vrcp.pop %v112
    %v114 = vmul.f32 %v105, %v113
    %v115 = vmul.f32 %v114, -0.5
    %v116 = vmul.f32 %v114, 0.5
    %v118 = vrot.slane %v116, 1
    %v120 = vadd.f32 %v84, %v118
    %v122 = vrot.slane %v82, 5
    %v125 = vrot.slane %v83, 5
    %v128 = vrot.slane %v115, 3
    %v130 = vrot.slane %v116, 3
    %v132 = vsel %vm34, %v58, %v59
    %v133 = vsel %vm36, %v132, %v59
    %v134 = vsel %vm38, %v133, %v122
    %vm135 = vcmask 1043456
    %v136 = vsel %vm135, %v134, %v125
    %vm137 = vcmask 1044480
    %v138 = vsel %vm137, %v136, %v128
    %vm139 = vcmask 1045504
    %v140 = vsel %vm139, %v138, %v128
    %vm141 = vcmask 1046528
    %v142 = vsel %vm141, %v140, %v130
    %143 = vst [vmem:[#allocation6] sm:$0xff] %v142
    %v144 = vrot.slane %v82, 7
    %v147 = vrot.slane %v120, 7
    %v150 = vrot.slane %v59, 7
    %v152 = vsel %vm34, %v58, %v144
    %v153 = vsel %vm36, %v152, %v147
    %v154 = vsel %vm38, %v153, %v150
    %v155 = vsel %vm135, %v154, 0.0
    %v156 = vsel %vm137, %v155, %v128
    %v157 = vsel %vm139, %v156, %v128
    %v158 = vsel %vm141, %v157, 0.0
    %159 = vst [vmem:[#allocation5] sm:$0xff] %v158
    // Predicated region
    $region10: #{tpu_custom_call.1} parent=1 // pred_check
      _
    $region11: #{tpu_custom_call.1} parent=1 // pred_check_branch
      %161 = sbr.rel (0) target = $region13
    $region12: #{tpu_custom_call.1} parent=1 // pred_region
      %s163 = ssub.s32 128, 128
      %164 = vsyncadd [#allocation4], %s163
      %s166 = sshll.u32 [#allocation5], 4
      %s167 = int_to_ptr.vmem [resolvable:$true] %s166
      %169 = dma.vmem_to_hbm [thread:$0]  %s167, 128, %s1, [#allocation4]
    $region13: #{tpu_custom_call.1} parent=1 // pred_fallthru
      _
    // Predicated region
    $region14: #{tpu_custom_call.1} parent=1 // pred_check
      _
    $region15: #{tpu_custom_call.1} parent=1 // pred_check_branch
      %171 = sbr.rel (0) target = $region17
    $region16: #{tpu_custom_call.1} parent=1 // pred_region
      %s173 = ssub.s32 128, 128
      %174 = vsyncadd [#allocation7], %s173
      %s176 = sshll.u32 [#allocation6], 4
      %s177 = int_to_ptr.vmem [resolvable:$true] %s176
      %179 = dma.vmem_to_hbm [thread:$0]  %s177, 128, %s2, [#allocation7]
    $region17: #{tpu_custom_call.1} parent=1 // pred_fallthru
      _
    // Predicated region
    $region18: #{tpu_custom_call.1} parent=1 // pred_check
      _
    $region19: #{tpu_custom_call.1} parent=1 // pred_check_branch
      %181 = sbr.rel (0) target = $region21
    $region20: #{tpu_custom_call.1} parent=1 // pred_region
      %182 = dma.done [#allocation4], 128
    $region21: #{tpu_custom_call.1} parent=1 // pred_fallthru
      _
    // Predicated region
    $region22: #{tpu_custom_call.1} parent=1 // pred_check
      _
    $region23: #{tpu_custom_call.1} parent=1 // pred_check_branch
      %184 = sbr.rel (0) target = $region25
    $region24: #{tpu_custom_call.1} parent=1 // pred_region
      %185 = dma.done [#allocation7], 128
    $region25: #{tpu_custom_call.1} parent=1 // pred_fallthru
      _
    %186 = vsyncpa [#allocation3], 1
    %187 = vsyncpa [#allocation4], 1
    %188 = vsyncpa [#allocation7], 1

</llo_original>
